<compile_context>
chip_gen: v6e
topology: v6e:2x2x1
jax: 0.10.0
libtpu: 0.0.40
codegen_flags: <defaults>
</compile_context>

<pallas_src>
import functools

import jax
import jax.numpy as jnp
from jax.experimental import pallas as pl
from jax.experimental.pallas import tpu as pltpu

EPS = 1e-5                       # torch.nn.InstanceNorm2d default


def _round_up(v, m):
    return ((v + m - 1) // m) * m


def _vmem_limit_bytes():
    """Generation-aware scoped-VMEM limit (v5e/v6e: 128 MiB, v7x: 64 MiB)."""
    try:
        kind = jax.devices()[0].device_kind.lower()
    except Exception:  # pragma: no cover - defensive
        kind = ""
    if "v5" in kind or "v6" in kind:
        return 100 * 1024 * 1024
    return 48 * 1024 * 1024


def _plan_tiles(p, k_pad, c_pad, c_sub, vmem_limit, force_two_pass):
    """Pick the P tile, padded P, and whether the fused single pass fits VMEM."""
    budget = int(vmem_limit * 0.5)
    p8 = _round_up(p, 8)
    if p8 <= 512:
        tp = p8                                    # whole P in a single tile
    else:
        tp = 2048                                  # multiples of 256: feed the
        while tp > 256 and 2 * tp * (k_pad + c_pad) * 2 > budget:
            tp //= 2                               # 256-wide MXU, lane-dense
    p_pad = _round_up(p, tp)
    n_pt = p_pad // tp
    # Fused residency estimate: output block (2 bufs) + weight (2 bufs)
    # + patch tiles (2 bufs) + stats scratch.
    fused_bytes = (2 * c_sub * p_pad * 4 + 2 * c_pad * k_pad * 2
                   + 2 * tp * k_pad * 2 + 4 * c_pad * 4)
    fuse = (not force_two_pass) and fused_bytes <= int(vmem_limit * 0.75)
    return tp, p_pad, n_pt, fuse


# ---------------------------------------------------------------------------
# Fused pass: conv (MXU) + per-(sample, channel) stats + InstanceNorm + GLU.
# The resident output block is reused as the conv accumulator across P tiles.
# ---------------------------------------------------------------------------
def _fused_kernel(patches_ref, w_ref, gamma_ref, beta_ref, o_ref,
                  sum_acc, ssq_acc, *, p_real, tp, n_pt, c_sub):
    pt = pl.program_id(1)

    @pl.when(pt == 0)
    def _init():
        sum_acc[...] = jnp.zeros_like(sum_acc)
        ssq_acc[...] = jnp.zeros_like(ssq_acc)

    # Conv tile on the MXU: (c_pad, k_pad) @ (k_pad, tp) -> (c_pad, tp), f32 acc.
    y = jnp.dot(w_ref[...], patches_ref[0], preferred_element_type=jnp.float32)

    # Per-channel partial statistics over spatial positions (padded P columns
    # come from all-zero patches and contribute 0 to both sums).
    sum_acc[...] += jnp.sum(y, axis=1, keepdims=True)        # (c_pad, 1)
    ssq_acc[...] += jnp.sum(y * y, axis=1, keepdims=True)    # (c_pad, 1)

    # Stash the raw conv tile in the resident output block (acts as the conv
    # accumulator; overwritten with the normalized + GLU value at the last tile).
    if n_pt == 1:
        o_ref[0] = y[:c_sub, :]
    else:
        col0 = pl.multiple_of(pt * tp, tp)
        o_ref[0, :, pl.ds(col0, tp)] = y[:c_sub, :]

    @pl.when(pt == n_pt - 1)
    def _finalize():
        # NOTE: var = E[y^2] - mean^2 with f32 accumulation; adequate at these
        # spatial sizes (guarded by the max(., 0)); switch to a shifted
        # accumulation if tolerances ever tighten.
        inv_p = jnp.float32(1.0 / p_real)          # divide by TRUE spatial size
        mean = sum_acc[...] * inv_p
        var = jnp.maximum(ssq_acc[...] * inv_p - mean * mean, 0.0)
        scale = gamma_ref[...] * jax.lax.rsqrt(var + EPS)     # (c_pad, 1)
        shift = beta_ref[...] - mean * scale
        z = o_ref[0] * scale[:c_sub, :] + shift[:c_sub, :]    # (c_sub, p_pad)
        o_ref[0] = z * jax.nn.sigmoid(z)                      # GLU: x*sigmoid(x)


# ---------------------------------------------------------------------------
# Two-pass fallback, pass 1: conv tiles + stats; bf16 conv intermediate.
# ---------------------------------------------------------------------------
def _conv_stats_kernel(patches_ref, w_ref, gamma_ref, beta_ref,
                       y_ref, scale_ref, shift_ref,
                       sum_acc, ssq_acc, *, p_real, c_sub):
    pt = pl.program_id(1)

    @pl.when(pt == 0)
    def _init():
        sum_acc[...] = jnp.zeros_like(sum_acc)
        ssq_acc[...] = jnp.zeros_like(ssq_acc)

    y = jnp.dot(w_ref[...], patches_ref[0], preferred_element_type=jnp.float32)
    y_ref[0] = y[:c_sub, :].astype(y_ref.dtype)              # bf16 writeback
    sum_acc[...] += jnp.sum(y, axis=1, keepdims=True)
    ssq_acc[...] += jnp.sum(y * y, axis=1, keepdims=True)

    @pl.when(pt == pl.num_programs(1) - 1)
    def _finalize():
        inv_p = jnp.float32(1.0 / p_real)
        mean = sum_acc[...] * inv_p
        var = jnp.maximum(ssq_acc[...] * inv_p - mean * mean, 0.0)
        scale = gamma_ref[...] * jax.lax.rsqrt(var + EPS)
        shift = beta_ref[...] - mean * scale
        scale_ref[0] = scale[:c_sub, :]
        shift_ref[0] = shift[:c_sub, :]


# ---------------------------------------------------------------------------
# Two-pass fallback, pass 2: normalize + affine + GLU (fully parallel).
# ---------------------------------------------------------------------------
def _norm_glu_kernel(y_ref, scale_ref, shift_ref, o_ref):
    z = y_ref[0].astype(jnp.float32) * scale_ref[0] + shift_ref[0]
    o_ref[0] = (z * jax.nn.sigmoid(z)).astype(o_ref.dtype)


# ---------------------------------------------------------------------------
# im2col in (K, P) layout so the MXU output tile has P on the lanes.
# ---------------------------------------------------------------------------
def _im2col_kp(x, kh, kw, sh, sw, ph, pw):
    """x: (N, C, H, W) -> patches (N, C*KH*KW, OH*OW), channel-major K."""
    n, c, h, w = x.shape
    xp = jnp.pad(x, ((0, 0), (0, 0), (ph, ph), (pw, pw)))
    oh = (h + 2 * ph - kh) // sh + 1
    ow = (w + 2 * pw - kw) // sw + 1
    cols = []
    for i in range(kh):
        for j in range(kw):
            cols.append(xp[:, :, i:i + sh * oh:sh, j:j + sw * ow:sw])
    patches = jnp.stack(cols, axis=2)                 # (N, C, KH*KW, OH, OW)
    patches = patches.reshape(n, c * kh * kw, oh * ow)
    return patches, oh, ow


@functools.partial(jax.jit,
                   static_argnames=("stride", "padding", "force_two_pass"))
def down_sample_discriminator(x, weight, bias, gamma, beta, *, stride, padding,
                              force_two_pass=False):
    """x: (N, C_in, H, W) NCHW.  weight: (C_out, C_in, KH, KW) (torch layout)."""
    del bias  # cancels exactly under InstanceNorm2d (see header comment)

    n, c_in, h, w = x.shape
    c_out, _, kh, kw = weight.shape
    sh, sw = stride
    ph, pw = padding

    # Stopgap for the im2col HBM round-trip: build patches in bf16.
    # TODO(synk): fuse im2col into the kernel (stream padded input row-bands).
    patches, oh, ow = _im2col_kp(x.astype(jnp.bfloat16), kh, kw, sh, sw, ph, pw)
    p = oh * ow
    k = c_in * kh * kw

    k_pad = _round_up(k, 128)        # MXU contraction, zero-pad => exact
    c_pad = _round_up(c_out, 128)    # MXU output rows (compute only)
    c_sub = _round_up(c_out, 8)      # output sublane pad only: no 16x lane pad

    vmem_limit = _vmem_limit_bytes()
    tp, p_pad, n_pt, fuse = _plan_tiles(p, k_pad, c_pad, c_sub, vmem_limit,
                                        force_two_pass)

    patches = jnp.pad(patches, ((0, 0), (0, k_pad - k), (0, p_pad - p)))
    w_mat = jnp.pad(weight.reshape(c_out, k),
                    ((0, c_pad - c_out), (0, k_pad - k))).astype(jnp.bfloat16)
    g_col = jnp.pad(gamma.astype(jnp.float32).reshape(c_out, 1),
                    ((0, c_pad - c_out), (0, 0)))
    b_col = jnp.pad(beta.astype(jnp.float32).reshape(c_out, 1),
                    ((0, c_pad - c_out), (0, 0)))

    in_specs = [
        pl.BlockSpec((1, k_pad, tp), lambda b, t: (b, 0, t)),
        pl.BlockSpec((c_pad, k_pad), lambda b, t: (0, 0)),
        pl.BlockSpec((c_pad, 1), lambda b, t: (0, 0)),
        pl.BlockSpec((c_pad, 1), lambda b, t: (0, 0)),
    ]
    stats_scratch = [pltpu.VMEM((c_pad, 1), jnp.float32),
                     pltpu.VMEM((c_pad, 1), jnp.float32)]

    if fuse:
        # ---- Single fused pass: conv + stats + InstanceNorm + GLU ----
        out = pl.pallas_call(
            functools.partial(_fused_kernel, p_real=float(p), tp=tp,
                              n_pt=n_pt, c_sub=c_sub),
            out_shape=jax.ShapeDtypeStruct((n, c_sub, p_pad), jnp.float32),
            grid_spec=pltpu.PrefetchScalarGridSpec(
                num_scalar_prefetch=0,
                grid=(n, n_pt),
                in_specs=in_specs,
                out_specs=pl.BlockSpec((1, c_sub, p_pad), lambda b, t: (b, 0, 0)),
                scratch_shapes=stats_scratch,
            ),
            compiler_params=pltpu.CompilerParams(
                dimension_semantics=("parallel", "arbitrary"),
                vmem_limit_bytes=vmem_limit),
        )(patches, w_mat, g_col, b_col)
    else:
        # ---- Pass 1: conv + statistics (bf16 conv intermediate) ----
        y_conv, scale, shift = pl.pallas_call(
            functools.partial(_conv_stats_kernel, p_real=float(p), c_sub=c_sub),
            out_shape=(
                jax.ShapeDtypeStruct((n, c_sub, p_pad), jnp.bfloat16),
                jax.ShapeDtypeStruct((n, c_sub, 1), jnp.float32),
                jax.ShapeDtypeStruct((n, c_sub, 1), jnp.float32),
            ),
            grid_spec=pltpu.PrefetchScalarGridSpec(
                num_scalar_prefetch=0,
                grid=(n, n_pt),
                in_specs=in_specs,
                out_specs=[
                    pl.BlockSpec((1, c_sub, tp), lambda b, t: (b, 0, t)),
                    pl.BlockSpec((1, c_sub, 1), lambda b, t: (b, 0, 0)),
                    pl.BlockSpec((1, c_sub, 1), lambda b, t: (b, 0, 0)),
                ],
                scratch_shapes=stats_scratch,
            ),
            compiler_params=pltpu.CompilerParams(
                dimension_semantics=("parallel", "arbitrary"),
                vmem_limit_bytes=vmem_limit),
        )(patches, w_mat, g_col, b_col)

        # ---- Pass 2: normalize + affine + GLU (lane-dense (c_sub, tp)) ----
        out = pl.pallas_call(
            _norm_glu_kernel,
            out_shape=jax.ShapeDtypeStruct((n, c_sub, p_pad), jnp.float32),
            grid_spec=pltpu.PrefetchScalarGridSpec(
                num_scalar_prefetch=0,
                grid=(n, n_pt),
                in_specs=[
                    pl.BlockSpec((1, c_sub, tp), lambda b, t: (b, 0, t)),
                    pl.BlockSpec((1, c_sub, 1), lambda b, t: (b, 0, 0)),
                    pl.BlockSpec((1, c_sub, 1), lambda b, t: (b, 0, 0)),
                ],
                out_specs=pl.BlockSpec((1, c_sub, tp), lambda b, t: (b, 0, t)),
            ),
            compiler_params=pltpu.CompilerParams(
                dimension_semantics=("parallel", "parallel"),
                vmem_limit_bytes=vmem_limit),
        )(y_conv, scale, shift)

    # Output already lives in (N, C, P) layout: just drop padding and reshape.
    return out[:, :c_out, :p].reshape(n, c_out, oh, ow)


# ---------------------------------------------------------------------------
# Pure-JAX reference (mirrors the PyTorch module) for a sanity check.
# ---------------------------------------------------------------------------
def reference(x, weight, bias, gamma, beta, *, stride, padding):
    y = jax.lax.conv_general_dilated(
        x, weight, window_strides=stride,
        padding=[(padding[0], padding[0]), (padding[1], padding[1])],
        dimension_numbers=("NCHW", "OIHW", "NCHW"))
    y = y + bias.reshape(1, -1, 1, 1)
    mean = jnp.mean(y, axis=(2, 3), keepdims=True)
    var = jnp.mean((y - mean) ** 2, axis=(2, 3), keepdims=True)
    z = (y - mean) / jnp.sqrt(var + EPS)
    z = z * gamma.reshape(1, -1, 1, 1) + beta.reshape(1, -1, 1, 1)
    return z * jax.nn.sigmoid(z)


if __name__ == "__main__":
    # Small shapes consistent with the discriminator's down-sample block.
    N, C_IN, H, W = 2, 4, 16, 16
    C_OUT, K_SZ, STRIDE, PAD = 8, (3, 3), (2, 2), (1, 1)

    key = jax.random.PRNGKey(0)
    kx, kw_, kb, kg, kbt = jax.random.split(key, 5)
    x = jax.random.normal(kx, (N, C_IN, H, W), jnp.float32)
    weight = jax.random.normal(kw_, (C_OUT, C_IN, *K_SZ), jnp.float32) * 0.1
    bias = jax.random.normal(kb, (C_OUT,), jnp.float32) * 0.1
    gamma = 1.0 + 0.1 * jax.random.normal(kg, (C_OUT,), jnp.float32)
    beta = 0.1 * jax.random.normal(kbt, (C_OUT,), jnp.float32)

    # Reference on bf16-rounded conv inputs (kernel runs the matmul in bf16
    # with f32 accumulation); norm / affine / GLU stay f32.
    x_bf = x.astype(jnp.bfloat16).astype(jnp.float32)
    w_bf = weight.astype(jnp.bfloat16).astype(jnp.float32)
    ref = reference(x_bf, w_bf, bias, gamma, beta, stride=STRIDE, padding=PAD)

    # Fused single-pass path (the default at these sizes).
    out = down_sample_discriminator(
        x, weight, bias, gamma, beta, stride=STRIDE, padding=PAD)
    out = jax.block_until_ready(out)
    assert out.shape == ref.shape == (N, C_OUT, H // 2, W // 2), out.shape
    err = float(jnp.max(jnp.abs(out - ref)))
    assert jnp.allclose(out, ref, rtol=1e-3, atol=1e-3), err

    # Also exercise the two-pass fallback (bf16 conv intermediate); the extra
    # bf16 rounding of the normalized value needs a slightly looser tolerance.
    out2 = down_sample_discriminator(
        x, weight, bias, gamma, beta, stride=STRIDE, padding=PAD,
        force_two_pass=True)
    out2 = jax.block_until_ready(out2)
    err2 = float(jnp.max(jnp.abs(out2 - ref)))
    assert jnp.allclose(out2, ref, rtol=2e-2, atol=2e-2), err2

    print("KERNEL_OK")
</pallas_src>

<mosaic_0001>
module attributes {stable_mosaic.version = 11 : i64} {
  func.func @_fused_kernel(%arg0: i32, %arg1: i32, %arg2: memref<1x128x64xbf16, #tpu.memory_space<vmem>>, %arg3: memref<128x128xbf16, #tpu.memory_space<vmem>>, %arg4: memref<128x1xf32, #tpu.memory_space<vmem>>, %arg5: memref<128x1xf32, #tpu.memory_space<vmem>>, %arg6: memref<1x8x64xf32, #tpu.memory_space<vmem>>, %arg7: memref<128x1xf32, #tpu.memory_space<vmem>>, %arg8: memref<128x1xf32, #tpu.memory_space<vmem>>) attributes {dimension_semantics = [#tpu.dimension_semantics<parallel>, #tpu.dimension_semantics<arbitrary>], iteration_bounds = array<i64: 2, 1>, scalar_prefetch = 0 : i64, scratch_operands = 2 : i64, tpu.core_type = #tpu.core_type<tc>, window_params = [{transform_indices = @transform_0, window_bounds = array<i64: 1, 128, 64>}, {pipeline_mode = #tpu.pipeline_mode<synchronous>, transform_indices = @transform_1, window_bounds = array<i64: 128, 128>}, {pipeline_mode = #tpu.pipeline_mode<synchronous>, transform_indices = @transform_2, window_bounds = array<i64: 128, 1>}, {pipeline_mode = #tpu.pipeline_mode<synchronous>, transform_indices = @transform_3, window_bounds = array<i64: 128, 1>}, {transform_indices = @transform_4, window_bounds = array<i64: 1, 8, 64>}]} {
    %c0_i32 = arith.constant 0 : i32
    %0 = arith.cmpi eq, %arg1, %c0_i32 : i32
    %1 = arith.extui %0 : i1 to i32
    %c0_i32_0 = arith.constant 0 : i32
    %2 = arith.cmpi ne, %1, %c0_i32_0 : i32
    scf.if %2 {
      %cst_20 = arith.constant 0.000000e+00 : f32
      %25 = vector.broadcast %cst_20 : f32 to vector<128x1xf32>
      %c0_21 = arith.constant 0 : index
      %c0_22 = arith.constant 0 : index
      %26 = vector.load %arg7[%c0_21, %c0_22] : memref<128x1xf32, #tpu.memory_space<vmem>>, vector<128x1xf32>
      tpu.vector_store %arg7[%c0_21, %c0_22], %25 {strides = array<i32>} : memref<128x1xf32, #tpu.memory_space<vmem>>, vector<128x1xf32>,
      %cst_23 = arith.constant 0.000000e+00 : f32
      %27 = vector.broadcast %cst_23 : f32 to vector<128x1xf32>
      %c0_24 = arith.constant 0 : index
      %c0_25 = arith.constant 0 : index
      %28 = vector.load %arg8[%c0_24, %c0_25] : memref<128x1xf32, #tpu.memory_space<vmem>>, vector<128x1xf32>
      tpu.vector_store %arg8[%c0_24, %c0_25], %27 {strides = array<i32>} : memref<128x1xf32, #tpu.memory_space<vmem>>, vector<128x1xf32>,
    } else {
    }
    %c0 = arith.constant 0 : index
    %c0_1 = arith.constant 0 : index
    %3 = vector.load %arg3[%c0, %c0_1] : memref<128x128xbf16, #tpu.memory_space<vmem>>, vector<128x128xbf16>
    %c0_2 = arith.constant 0 : index
    %c0_3 = arith.constant 0 : index
    %c0_4 = arith.constant 0 : index
    %4 = vector.load %arg2[%c0_2, %c0_3, %c0_4] : memref<1x128x64xbf16, #tpu.memory_space<vmem>>, vector<1x128x64xbf16>
    %5 = vector.shape_cast %4 : vector<1x128x64xbf16> to vector<128x64xbf16>
    %cst = arith.constant dense<0.000000e+00> : vector<128x64xf32>
    %6 = tpu.matmul %3, %5, %cst {dimension_numbers = #tpu.dot_dimension_numbers<[1], [0], [0], [1], [0, 0, 1, 1], [], []>} : vector<128x128xbf16>, vector<128x64xbf16>, vector<128x64xf32> -> vector<128x64xf32>
    %c0_5 = arith.constant 0 : index
    %c0_6 = arith.constant 0 : index
    %7 = vector.load %arg7[%c0_5, %c0_6] : memref<128x1xf32, #tpu.memory_space<vmem>>, vector<128x1xf32>
    %cst_7 = arith.constant dense<0.000000e+00> : vector<128xf32>
    %8 = vector.multi_reduction <add>, %6, %cst_7 [1] : vector<128x64xf32> to vector<128xf32>
    %9 = vector.shape_cast %8 : vector<128xf32> to vector<128x1xf32>
    %10 = arith.addf %7, %9 : vector<128x1xf32>
    %c0_8 = arith.constant 0 : index
    %c0_9 = arith.constant 0 : index
    %11 = vector.load %arg7[%c0_8, %c0_9] : memref<128x1xf32, #tpu.memory_space<vmem>>, vector<128x1xf32>
    tpu.vector_store %arg7[%c0_8, %c0_9], %10 {strides = array<i32>} : memref<128x1xf32, #tpu.memory_space<vmem>>, vector<128x1xf32>,
    %c0_10 = arith.constant 0 : index
    %c0_11 = arith.constant 0 : index
    %12 = vector.load %arg8[%c0_10, %c0_11] : memref<128x1xf32, #tpu.memory_space<vmem>>, vector<128x1xf32>
    %13 = arith.mulf %6, %6 : vector<128x64xf32>
    %cst_12 = arith.constant dense<0.000000e+00> : vector<128xf32>
    %14 = vector.multi_reduction <add>, %13, %cst_12 [1] : vector<128x64xf32> to vector<128xf32>
    %15 = vector.shape_cast %14 : vector<128xf32> to vector<128x1xf32>
    %16 = arith.addf %12, %15 : vector<128x1xf32>
    %c0_13 = arith.constant 0 : index
    %c0_14 = arith.constant 0 : index
    %17 = vector.load %arg8[%c0_13, %c0_14] : memref<128x1xf32, #tpu.memory_space<vmem>>, vector<128x1xf32>
    tpu.vector_store %arg8[%c0_13, %c0_14], %16 {strides = array<i32>} : memref<128x1xf32, #tpu.memory_space<vmem>>, vector<128x1xf32>,
    %18 = vector.extract_strided_slice %6 {offsets = [0, 0], sizes = [8, 64], strides = [1, 1]} : vector<128x64xf32> to vector<8x64xf32>
    %c0_15 = arith.constant 0 : index
    %c0_16 = arith.constant 0 : index
    %c0_17 = arith.constant 0 : index
    %19 = vector.load %arg6[%c0_15, %c0_16, %c0_17] : memref<1x8x64xf32, #tpu.memory_space<vmem>>, vector<1x8x64xf32>
    %20 = vector.shape_cast %19 : vector<1x8x64xf32> to vector<8x64xf32>
    %21 = vector.shape_cast %18 : vector<8x64xf32> to vector<1x8x64xf32>
    tpu.vector_store %arg6[%c0_15, %c0_16, %c0_17], %21 {strides = array<i32>} : memref<1x8x64xf32, #tpu.memory_space<vmem>>, vector<1x8x64xf32>,
    %c0_i32_18 = arith.constant 0 : i32
    %22 = arith.cmpi eq, %arg1, %c0_i32_18 : i32
    %23 = arith.extui %22 : i1 to i32
    %c0_i32_19 = arith.constant 0 : i32
    %24 = arith.cmpi ne, %23, %c0_i32_19 : i32
    scf.if %24 {
      %c0_20 = arith.constant 0 : index
      %c0_21 = arith.constant 0 : index
      %25 = vector.load %arg7[%c0_20, %c0_21] : memref<128x1xf32, #tpu.memory_space<vmem>>, vector<128x1xf32>
      %cst_22 = arith.constant 1.562500e-02 : f32
      %26 = vector.broadcast %cst_22 : f32 to vector<128x1xf32>
      %27 = arith.mulf %25, %26 : vector<128x1xf32>
      %c0_23 = arith.constant 0 : index
      %c0_24 = arith.constant 0 : index
      %28 = vector.load %arg8[%c0_23, %c0_24] : memref<128x1xf32, #tpu.memory_space<vmem>>, vector<128x1xf32>
      %cst_25 = arith.constant 1.562500e-02 : f32
      %29 = vector.broadcast %cst_25 : f32 to vector<128x1xf32>
      %30 = arith.mulf %28, %29 : vector<128x1xf32>
      %31 = arith.mulf %27, %27 : vector<128x1xf32>
      %32 = arith.subf %30, %31 : vector<128x1xf32>
      %cst_26 = arith.constant 0.000000e+00 : f32
      %33 = vector.broadcast %cst_26 : f32 to vector<128x1xf32>
      %34 = arith.maximumf %32, %33 : vector<128x1xf32>
      %c0_27 = arith.constant 0 : index
      %c0_28 = arith.constant 0 : index
      %35 = vector.load %arg4[%c0_27, %c0_28] : memref<128x1xf32, #tpu.memory_space<vmem>>, vector<128x1xf32>
      %cst_29 = arith.constant 9.99999974E-6 : f32
      %36 = vector.broadcast %cst_29 : f32 to vector<128x1xf32>
      %37 = arith.addf %34, %36 : vector<128x1xf32>
      %38 = math.rsqrt %37 : vector<128x1xf32>
      %39 = arith.mulf %35, %38 : vector<128x1xf32>
      %c0_30 = arith.constant 0 : index
      %c0_31 = arith.constant 0 : index
      %40 = vector.load %arg5[%c0_30, %c0_31] : memref<128x1xf32, #tpu.memory_space<vmem>>, vector<128x1xf32>
      %41 = arith.mulf %27, %39 : vector<128x1xf32>
      %42 = arith.subf %40, %41 : vector<128x1xf32>
      %c0_32 = arith.constant 0 : index
      %c0_33 = arith.constant 0 : index
      %c0_34 = arith.constant 0 : index
      %43 = vector.load %arg6[%c0_32, %c0_33, %c0_34] : memref<1x8x64xf32, #tpu.memory_space<vmem>>, vector<1x8x64xf32>
      %44 = vector.shape_cast %43 : vector<1x8x64xf32> to vector<8x64xf32>
      %45 = vector.extract_strided_slice %39 {offsets = [0, 0], sizes = [8, 1], strides = [1, 1]} : vector<128x1xf32> to vector<8x1xf32>
      %46 = vector.broadcast %45 : vector<8x1xf32> to vector<8x64xf32>
      %47 = arith.mulf %44, %46 : vector<8x64xf32>
      %48 = vector.extract_strided_slice %42 {offsets = [0, 0], sizes = [8, 1], strides = [1, 1]} : vector<128x1xf32> to vector<8x1xf32>
      %49 = vector.broadcast %48 : vector<8x1xf32> to vector<8x64xf32>
      %50 = arith.addf %47, %49 : vector<8x64xf32>
      %51 = arith.negf %50 : vector<8x64xf32>
      %52 = math.exp %51 : vector<8x64xf32>
      %cst_35 = arith.constant 1.000000e+00 : f32
      %53 = vector.broadcast %cst_35 : f32 to vector<8x64xf32>
      %54 = arith.addf %53, %52 : vector<8x64xf32>
      %55 = arith.divf %53, %54 : vector<8x64xf32>
      %56 = arith.mulf %50, %55 : vector<8x64xf32>
      %c0_36 = arith.constant 0 : index
      %c0_37 = arith.constant 0 : index
      %c0_38 = arith.constant 0 : index
      %57 = vector.load %arg6[%c0_36, %c0_37, %c0_38] : memref<1x8x64xf32, #tpu.memory_space<vmem>>, vector<1x8x64xf32>
      %58 = vector.shape_cast %57 : vector<1x8x64xf32> to vector<8x64xf32>
      %59 = vector.shape_cast %56 : vector<8x64xf32> to vector<1x8x64xf32>
      tpu.vector_store %arg6[%c0_36, %c0_37, %c0_38], %59 {strides = array<i32>} : memref<1x8x64xf32, #tpu.memory_space<vmem>>, vector<1x8x64xf32>,
    } else {
    }
    return
  }
  func.func @transform_0(%arg0: i32, %arg1: i32) -> (i32, i32, i32) {
    %c0_i32 = arith.constant 0 : i32
    %c0_i32_0 = arith.constant 0 : i32
    return %arg0, %c0_i32, %arg1 : i32, i32, i32
  }
  func.func @transform_1(%arg0: i32, %arg1: i32) -> (i32, i32) {
    %c0_i32 = arith.constant 0 : i32
    %c0_i32_0 = arith.constant 0 : i32
    %c0_i32_1 = arith.constant 0 : i32
    return %c0_i32, %c0_i32_0 : i32, i32
  }
  func.func @transform_2(%arg0: i32, %arg1: i32) -> (i32, i32) {
    %c0_i32 = arith.constant 0 : i32
    %c0_i32_0 = arith.constant 0 : i32
    %c0_i32_1 = arith.constant 0 : i32
    return %c0_i32, %c0_i32_0 : i32, i32
  }
  func.func @transform_3(%arg0: i32, %arg1: i32) -> (i32, i32) {
    %c0_i32 = arith.constant 0 : i32
    %c0_i32_0 = arith.constant 0 : i32
    %c0_i32_1 = arith.constant 0 : i32
    return %c0_i32, %c0_i32_0 : i32, i32
  }
  func.func @transform_4(%arg0: i32, %arg1: i32) -> (i32, i32, i32) {
    %c0_i32 = arith.constant 0 : i32
    %c0_i32_0 = arith.constant 0 : i32
    %c0_i32_1 = arith.constant 0 : i32
    return %arg0, %c0_i32, %c0_i32_0 : i32, i32, i32
  }
}

</mosaic_0001>

<llo_original>
// kernel: down_sample_discriminator.1
$region0: #{down_sample_discriminator.1}
  #allocation0 [shape = 'u32[]', space=smem, size = 0x4, offset = 0x4, fixed_abs, tag = 'smem constant byte address 0x4 - core index']
  #allocation1 [shape = 'u32[144,128]{1,0:T(1,128)}', space=vmem, size = 0x12000, scoped, tag = 'internal scratch']
  #allocation2 [shape = 'f32[128,1]{1,0:T(8,128)}', space=vmem, size = 0x10000, scoped, tag = 'scratch operand']
  #allocation3 [shape = 'f32[128,1]{1,0:T(8,128)}', space=vmem, size = 0x10000, scoped, tag = 'scratch operand']
  %s0 = inlined_call_operand.vmem [shape: bf16[2,128,64], index: 0, kind: input, shape index: {}]
  %s1 = inlined_call_operand.vmem [shape: bf16[128,128], index: 1, kind: input, shape index: {}]
  %s2 = inlined_call_operand.vmem [shape: f32[128,1], index: 2, kind: input, shape index: {}]
  %s3 = inlined_call_operand.vmem [shape: f32[128,1], index: 3, kind: input, shape index: {}]
  %s4 = inlined_call_operand.vmem [shape: f32[2,8,64], index: 4, kind: output, shape index: {}]
  %s5 = sld [smem:[#allocation0]]
  $region57: #{down_sample_discriminator.1} parent=0
    _
  %s7 = ssub.s32 1, %s5
  %s8 = scalar_select 0, %s7, %s5
  loop: start=0, step=1, limit=4
  $region2: #{down_sample_discriminator.1} parent=0 // loop_pre_header
    _
  $region3: #{down_sample_discriminator.1} parent=0 // loop_header
    %s10 = sphi 0, %s14
    %p11 = scmp.ge.s32.totalorder %s10, 4
    %s17 = sphi 0, %s29
    %s18 = sphi 0, %s25
    %s19 = sphi 0, %s17
    %s20 = sphi 0, %s18
    %s21 = sphi 0, %s19
    %s22 = sphi 0, %s20
    %s34 = sphi 0, %s36
    %s37 = sphi 0, %s34
    %s38 = sphi 0, %s37
    %s54 = sphi 0, %s38
    %s58 = sphi 0, %s58
    %s60 = sphi 0, %s58
    %s61 = sphi 0, %s60
    %s75 = sphi 0, %s61
    %s79 = sphi 0, %s79
    %s81 = sphi 0, %s79
    %s82 = sphi 0, %s81
    %s96 = sphi 0, %s82
    %s100 = sphi 0, %s100
    %s102 = sphi 0, %s100
    %s103 = sphi 0, %s102
    %s117 = sphi 0, %s103
    %s123 = sphi 0, %s125
    %s126 = sphi 0, %s123
    %s127 = sphi 0, %s126
    %s143 = sphi 0, %s127
  $region4: #{down_sample_discriminator.1} parent=0 // loop_header_branch
    %13 = sbr.rel (%p11) target = $region8
  $region5: #{down_sample_discriminator.1} parent=0 // loop_body
    %s15 = ssub.s32 %s10, 1
    %s16 = ssub.s32 %s10, 2
    %s23 = sadd.s32 1, %s18
    %p24 = scmp.ge.s32.totalorder %s23, 1
    %s25 = scalar_select %p24, 0, %s23
    %s26 = sadd.s32 1, %s17
    %s27 = scalar_select %p24, %s26, %s17
    %p28 = scmp.ge.s32.totalorder %s27, 2
    %s29 = scalar_select %p28, 0, %s27
    %s30 = ssub.s32 %s17, %s29
    %s31 = ssub.s32 %s18, %s25
    %s32 = sor.u32 %s30, %s31
    %p33 = scmp.eq.s32.totalorder %s32, 0
    %s35 = sadd.s32 %s34, 1
    %s36 = scalar_select %p33, %s34, %s35
    %p39 = pneg %p33
    %p40 = scmp.eq.s32.totalorder %s10, 1
    %p41 = por %p39, %p40
    %p42 = scmp.ne.s32.totalorder %s34, %s37
    %p43 = scmp.eq.s32.totalorder %s10, 0
    %p44 = por %p42, %p43
    %p45 = scmp.ne.s32.totalorder %s34, %s37
    %p46 = scmp.eq.s32.totalorder %s15, 1
    %p47 = por %p45, %p46
    %p48 = scmp.ne.s32.totalorder %s37, %s38
    %p49 = scmp.eq.s32.totalorder %s15, 0
    %p50 = por %p48, %p49
    %p51 = scmp.ne.s32.totalorder %s37, %s38
    %p52 = scmp.eq.s32.totalorder %s16, 1
    %p53 = por %p51, %p52
    %p55 = scmp.ne.s32.totalorder %s38, %s54
    %p56 = scmp.eq.s32.totalorder %s16, 0
    %p57 = por %p55, %p56
    %s59 = sadd.s32 %s58, 1
    %p62 = scmp.eq.s32.totalorder %s10, 1
    %p63 = scmp.ne.s32.totalorder %s58, %s60
    %p64 = scmp.eq.s32.totalorder %s10, 0
    %p65 = por %p63, %p64
    %p66 = scmp.ne.s32.totalorder %s58, %s60
    %p67 = scmp.eq.s32.totalorder %s15, 1
    %p68 = por %p66, %p67
    %p69 = scmp.ne.s32.totalorder %s60, %s61
    %p70 = scmp.eq.s32.totalorder %s15, 0
    %p71 = por %p69, %p70
    %p72 = scmp.ne.s32.totalorder %s60, %s61
    %p73 = scmp.eq.s32.totalorder %s16, 1
    %p74 = por %p72, %p73
    %p76 = scmp.ne.s32.totalorder %s61, %s75
    %p77 = scmp.eq.s32.totalorder %s16, 0
    %p78 = por %p76, %p77
    %s80 = sadd.s32 %s79, 1
    %p83 = scmp.eq.s32.totalorder %s10, 1
    %p84 = scmp.ne.s32.totalorder %s79, %s81
    %p85 = scmp.eq.s32.totalorder %s10, 0
    %p86 = por %p84, %p85
    %p87 = scmp.ne.s32.totalorder %s79, %s81
    %p88 = scmp.eq.s32.totalorder %s15, 1
    %p89 = por %p87, %p88
    %p90 = scmp.ne.s32.totalorder %s81, %s82
    %p91 = scmp.eq.s32.totalorder %s15, 0
    %p92 = por %p90, %p91
    %p93 = scmp.ne.s32.totalorder %s81, %s82
    %p94 = scmp.eq.s32.totalorder %s16, 1
    %p95 = por %p93, %p94
    %p97 = scmp.ne.s32.totalorder %s82, %s96
    %p98 = scmp.eq.s32.totalorder %s16, 0
    %p99 = por %p97, %p98
    %s101 = sadd.s32 %s100, 1
    %p104 = scmp.eq.s32.totalorder %s10, 1
    %p105 = scmp.ne.s32.totalorder %s100, %s102
    %p106 = scmp.eq.s32.totalorder %s10, 0
    %p107 = por %p105, %p106
    %p108 = scmp.ne.s32.totalorder %s100, %s102
    %p109 = scmp.eq.s32.totalorder %s15, 1
    %p110 = por %p108, %p109
    %p111 = scmp.ne.s32.totalorder %s102, %s103
    %p112 = scmp.eq.s32.totalorder %s15, 0
    %p113 = por %p111, %p112
    %p114 = scmp.ne.s32.totalorder %s102, %s103
    %p115 = scmp.eq.s32.totalorder %s16, 1
    %p116 = por %p114, %p115
    %p118 = scmp.ne.s32.totalorder %s103, %s117
    %p119 = scmp.eq.s32.totalorder %s16, 0
    %p120 = por %p118, %p119
    %s121 = ssub.s32 %s17, %s29
    %p122 = scmp.eq.s32.totalorder %s121, 0
    %s124 = sadd.s32 %s123, 1
    %s125 = scalar_select %p122, %s123, %s124
    %p128 = pneg %p122
    %p129 = scmp.eq.s32.totalorder %s10, 1
    %p130 = por %p128, %p129
    %p131 = scmp.ne.s32.totalorder %s123, %s126
    %p132 = scmp.eq.s32.totalorder %s10, 0
    %p133 = por %p131, %p132
    %p134 = scmp.ne.s32.totalorder %s123, %s126
    %p135 = scmp.eq.s32.totalorder %s15, 1
    %p136 = por %p134, %p135
    %p137 = scmp.ne.s32.totalorder %s126, %s127
    %p138 = scmp.eq.s32.totalorder %s15, 0
    %p139 = por %p137, %p138
    %p140 = scmp.ne.s32.totalorder %s126, %s127
    %p141 = scmp.eq.s32.totalorder %s16, 1
    %p142 = por %p140, %p141
    %p144 = scmp.ne.s32.totalorder %s127, %s143
    %p145 = scmp.eq.s32.totalorder %s16, 0
    %p146 = por %p144, %p145
    %p147 = scmp.le.s32.totalorder 1, %s10
    %p148 = scmp.lt.s32.totalorder %s10, 3
    %p149 = pnand %p147, %p148
    %p150 = pneg %p149
    // Predicated region
    $region9: #{down_sample_discriminator.1} parent=5 // pred_check
      _
    $region10: #{down_sample_discriminator.1} parent=5 // pred_check_branch
      %152 = sbr.rel (%p149) target = $region12
    $region11: #{down_sample_discriminator.1} parent=5 // pred_region
      %s153 = ssub.s32 %s10, 1
      // Predicated region
      $region13: #{down_sample_discriminator.1} parent=11 // pred_check
        %p154 = pneg %p71
      $region14: #{down_sample_discriminator.1} parent=11 // pred_check_branch
        %156 = sbr.rel (%p154) target = $region16
      $region15: #{down_sample_discriminator.1} parent=11 // pred_region
        _
      $region16: #{down_sample_discriminator.1} parent=11 // pred_fallthru
        _
      // Predicated region
      $region17: #{down_sample_discriminator.1} parent=11 // pred_check
        %p157 = pneg %p92
      $region18: #{down_sample_discriminator.1} parent=11 // pred_check_branch
        %159 = sbr.rel (%p157) target = $region20
      $region19: #{down_sample_discriminator.1} parent=11 // pred_region
        _
      $region20: #{down_sample_discriminator.1} parent=11 // pred_fallthru
        _
      // Predicated region
      $region21: #{down_sample_discriminator.1} parent=11 // pred_check
        %p160 = pneg %p113
      $region22: #{down_sample_discriminator.1} parent=11 // pred_check_branch
        %162 = sbr.rel (%p160) target = $region24
      $region23: #{down_sample_discriminator.1} parent=11 // pred_region
        _
      $region24: #{down_sample_discriminator.1} parent=11 // pred_fallthru
        _
    $region12: #{down_sample_discriminator.1} parent=5 // pred_fallthru
      _
    %p163 = scmp.lt.s32.totalorder %s10, 2
    // Predicated region
    $region25: #{down_sample_discriminator.1} parent=5 // pred_check
      %p164 = pneg %p163
    $region26: #{down_sample_discriminator.1} parent=5 // pred_check_branch
      %166 = sbr.rel (%p164) target = $region28
    $region27: #{down_sample_discriminator.1} parent=5 // pred_region
      // Predicated region
      $region29: #{down_sample_discriminator.1} parent=27 // pred_check
        %p167 = pneg %p44
      $region30: #{down_sample_discriminator.1} parent=27 // pred_check_branch
        %169 = sbr.rel (%p167) target = $region32
      $region31: #{down_sample_discriminator.1} parent=27 // pred_region
        %p170 = scmp.lt.s32.totalorder %s17, 1
        %s171 = scalar_select %p170, %s17, 1
        %p172 = scmp.lt.s32.totalorder %s18, 0
        %s173 = scalar_select %p172, %s18, 0
        %s174 = smul.addr %s171, 16
        %s175 = sadd.s32 %s173, %s174
        %s176 = smul.addr %s175, 4
        %s177 = scalar_lea.vmem %s0, %s176
      $region32: #{down_sample_discriminator.1} parent=27 // pred_fallthru
        _
    $region28: #{down_sample_discriminator.1} parent=5 // pred_fallthru
      _
    %p178 = scmp.le.s32.totalorder 1, %s10
    %p179 = scmp.lt.s32.totalorder %s10, 3
    %p180 = pnand %p178, %p179
    %p181 = pneg %p180
    // Predicated region
    $region33: #{down_sample_discriminator.1} parent=5 // pred_check
      _
    $region34: #{down_sample_discriminator.1} parent=5 // pred_check_branch
      %183 = sbr.rel (%p180) target = $region36
    $region35: #{down_sample_discriminator.1} parent=5 // pred_region
      %s184 = ssub.s32 %s10, 1
      %p185 = scmp.lt.s32.totalorder %s19, 1
      %s186 = scalar_select %p185, %s19, 1
      %p187 = scmp.lt.s32.totalorder %s20, 0
      %s188 = scalar_select %p187, %s20, 0
      %s189 = smul.addr %s186, 16
      %s190 = sadd.s32 %s188, %s189
      %s191 = smul.addr %s190, 4
      %s192 = scalar_lea.vmem %s0, %s191
      %p193 = pneg %p50
      %p194 = pneg %p47
      %p195 = pneg %p71
      %p196 = pneg %p68
      %p197 = pneg %p92
      %p198 = pneg %p89
      %p199 = pneg %p113
      %p200 = pneg %p110
      %p201 = pneg %p139
      %p202 = pneg %p136
      %p203 = scmp.lt.s32.totalorder %s19, 1
      %s204 = scalar_select %p203, %s19, 1
      %s205 = smul.addr %s204, 8
      %s206 = scalar_lea.vmem %s4, %s205
      %p207 = scmp.lt.s32.totalorder %s19, 1
      %s208 = scalar_select %p207, %s19, 1
      %p209 = scmp.lt.s32.totalorder %s20, 0
      %s210 = scalar_select %p209, %s20, 0
      %s211 = smul.addr %s208, 16
      %s212 = sadd.s32 %s210, %s211
      %s213 = smul.addr %s212, 4
      %s214 = scalar_lea.vmem %s0, %s213
      %p215 = scmp.lt.s32.totalorder %s19, 1
      %s216 = scalar_select %p215, %s19, 1
      %s217 = smul.addr %s216, 8
      %s218 = scalar_lea.vmem %s4, %s217
      %p220 = scmp.eq.s32.totalorder %s20, 0
      // Predicated region
      $region37: #{down_sample_discriminator.1} parent=35 // pred_check
        %p221 = pneg %p220
      $region38: #{down_sample_discriminator.1} parent=35 // pred_check_branch
        %223 = sbr.rel (%p221) target = $region40
      $region39: #{down_sample_discriminator.1} parent=35 // pred_region
        %vm224 = vcmask 7168
        %225 = vst.msk [vmem:[#allocation2] sm:$0xff] %vm224, 0.0
        %226 = vst.msk [vmem:[#allocation2 + $0x8] sm:$0xff] %vm224, 0.0
        %227 = vst.msk [vmem:[#allocation2 + $0x10] sm:$0xff] %vm224, 0.0
        %228 = vst.msk [vmem:[#allocation2 + $0x18] sm:$0xff] %vm224, 0.0
        %229 = vst.msk [vmem:[#allocation2 + $0x20] sm:$0xff] %vm224, 0.0
        %230 = vst.msk [vmem:[#allocation2 + $0x28] sm:$0xff] %vm224, 0.0
        %231 = vst.msk [vmem:[#allocation2 + $0x30] sm:$0xff] %vm224, 0.0
        %232 = vst.msk [vmem:[#allocation2 + $0x38] sm:$0xff] %vm224, 0.0
        %233 = vst.msk [vmem:[#allocation2 + $0x40] sm:$0xff] %vm224, 0.0
        %234 = vst.msk [vmem:[#allocation2 + $0x48] sm:$0xff] %vm224, 0.0
        %235 = vst.msk [vmem:[#allocation2 + $0x50] sm:$0xff] %vm224, 0.0
        %236 = vst.msk [vmem:[#allocation2 + $0x58] sm:$0xff] %vm224, 0.0
        %237 = vst.msk [vmem:[#allocation2 + $0x60] sm:$0xff] %vm224, 0.0
        %238 = vst.msk [vmem:[#allocation2 + $0x68] sm:$0xff] %vm224, 0.0
        %239 = vst.msk [vmem:[#allocation2 + $0x70] sm:$0xff] %vm224, 0.0
        %240 = vst.msk [vmem:[#allocation2 + $0x78] sm:$0xff] %vm224, 0.0
        %241 = vst.msk [vmem:[#allocation3] sm:$0xff] %vm224, 0.0
        %242 = vst.msk [vmem:[#allocation3 + $0x8] sm:$0xff] %vm224, 0.0
        %243 = vst.msk [vmem:[#allocation3 + $0x10] sm:$0xff] %vm224, 0.0
        %244 = vst.msk [vmem:[#allocation3 + $0x18] sm:$0xff] %vm224, 0.0
        %245 = vst.msk [vmem:[#allocation3 + $0x20] sm:$0xff] %vm224, 0.0
        %246 = vst.msk [vmem:[#allocation3 + $0x28] sm:$0xff] %vm224, 0.0
        %247 = vst.msk [vmem:[#allocation3 + $0x30] sm:$0xff] %vm224, 0.0
        %248 = vst.msk [vmem:[#allocation3 + $0x38] sm:$0xff] %vm224, 0.0
        %249 = vst.msk [vmem:[#allocation3 + $0x40] sm:$0xff] %vm224, 0.0
        %250 = vst.msk [vmem:[#allocation3 + $0x48] sm:$0xff] %vm224, 0.0
        %251 = vst.msk [vmem:[#allocation3 + $0x50] sm:$0xff] %vm224, 0.0
        %252 = vst.msk [vmem:[#allocation3 + $0x58] sm:$0xff] %vm224, 0.0
        %253 = vst.msk [vmem:[#allocation3 + $0x60] sm:$0xff] %vm224, 0.0
        %254 = vst.msk [vmem:[#allocation3 + $0x68] sm:$0xff] %vm224, 0.0
        %255 = vst.msk [vmem:[#allocation3 + $0x70] sm:$0xff] %vm224, 0.0
        %256 = vst.msk [vmem:[#allocation3 + $0x78] sm:$0xff] %vm224, 0.0
      $region40: #{down_sample_discriminator.1} parent=35 // pred_fallthru
        _
      %v257 = vld [vmem:[%s1] sm:$0xf]
      %v258 = vld [vmem:[%s1 + $0x4] sm:$0xf]
      %v259 = vld [vmem:[%s1 + $0x8] sm:$0xf]
      %v260 = vld [vmem:[%s1 + $0xc] sm:$0xf]
      %v261 = vld [vmem:[%s1 + $0x10] sm:$0xf]
      %v262 = vld [vmem:[%s1 + $0x14] sm:$0xf]
      %v263 = vld [vmem:[%s1 + $0x18] sm:$0xf]
      %v264 = vld [vmem:[%s1 + $0x1c] sm:$0xf]
      %v265 = vld [vmem:[%s1 + $0x20] sm:$0xf]
      %v266 = vld [vmem:[%s1 + $0x24] sm:$0xf]
      %v267 = vld [vmem:[%s1 + $0x28] sm:$0xf]
      %v268 = vld [vmem:[%s1 + $0x2c] sm:$0xf]
      %v269 = vld [vmem:[%s1 + $0x30] sm:$0xf]
      %v270 = vld [vmem:[%s1 + $0x34] sm:$0xf]
      %v271 = vld [vmem:[%s1 + $0x38] sm:$0xf]
      %v272 = vld [vmem:[%s1 + $0x3c] sm:$0xf]
      %v273 = vld [vmem:[%s214] sm:$0xf]
      %v274 = vld [vmem:[%s214 + $0x4] sm:$0xf]
      %v275 = vld [vmem:[%s214 + $0x8] sm:$0xf]
      %v276 = vld [vmem:[%s214 + $0xc] sm:$0xf]
      %v277 = vld [vmem:[%s214 + $0x10] sm:$0xf]
      %v278 = vld [vmem:[%s214 + $0x14] sm:$0xf]
      %v279 = vld [vmem:[%s214 + $0x18] sm:$0xf]
      %v280 = vld [vmem:[%s214 + $0x1c] sm:$0xf]
      %v281 = vld [vmem:[%s214 + $0x20] sm:$0xf]
      %v282 = vld [vmem:[%s214 + $0x24] sm:$0xf]
      %v283 = vld [vmem:[%s214 + $0x28] sm:$0xf]
      %v284 = vld [vmem:[%s214 + $0x2c] sm:$0xf]
      %v285 = vld [vmem:[%s214 + $0x30] sm:$0xf]
      %v286 = vld [vmem:[%s214 + $0x34] sm:$0xf]
      %v287 = vld [vmem:[%s214 + $0x38] sm:$0xf]
      %v288 = vld [vmem:[%s214 + $0x3c] sm:$0xf]
      %v305 = vunpack.c.l.b16 %v257
      %v306 = vunpack.c.l.b16 %v258
      %v307 = vunpack.c.l.b16 %v259
      %v308 = vunpack.c.l.b16 %v260
      %v309 = vunpack.c.l.b16 %v261
      %v310 = vunpack.c.l.b16 %v262
      %v311 = vunpack.c.l.b16 %v263
      %v312 = vunpack.c.l.b16 %v264
      %v313 = vunpack.c.l.b16 %v265
      %v314 = vunpack.c.l.b16 %v266
      %v315 = vunpack.c.l.b16 %v267
      %v316 = vunpack.c.l.b16 %v268
      %v317 = vunpack.c.l.b16 %v269
      %v318 = vunpack.c.l.b16 %v270
      %v319 = vunpack.c.l.b16 %v271
      %v320 = vunpack.c.l.b16 %v272
      %v321 = vpack.c.b16 %v306, %v305
      %v322 = vpack.c.b16 %v308, %v307
      %v323 = vpack.c.b16 %v310, %v309
      %v324 = vpack.c.b16 %v312, %v311
      %v325 = vpack.c.b16 %v314, %v313
      %v326 = vpack.c.b16 %v316, %v315
      %v327 = vpack.c.b16 %v318, %v317
      %v328 = vpack.c.b16 %v320, %v319
      %v353 = vunpack.c.l.b16 %v273
      %v354 = vunpack.c.l.b16 %v274
      %v355 = vunpack.c.l.b16 %v275
      %v356 = vunpack.c.l.b16 %v276
      %v357 = vunpack.c.l.b16 %v277
      %v358 = vunpack.c.l.b16 %v278
      %v359 = vunpack.c.l.b16 %v279
      %v360 = vunpack.c.l.b16 %v280
      %v361 = vunpack.c.l.b16 %v281
      %v362 = vunpack.c.l.b16 %v282
      %v363 = vunpack.c.l.b16 %v283
      %v364 = vunpack.c.l.b16 %v284
      %v365 = vunpack.c.l.b16 %v285
      %v366 = vunpack.c.l.b16 %v286
      %v367 = vunpack.c.l.b16 %v287
      %v368 = vunpack.c.l.b16 %v288
      %v369 = vpack.c.b16 %v354, %v353
      %v370 = vpack.c.b16 %v356, %v355
      %v371 = vpack.c.b16 %v358, %v357
      %v372 = vpack.c.b16 %v360, %v359
      %v373 = vpack.c.b16 %v362, %v361
      %v374 = vpack.c.b16 %v364, %v363
      %v375 = vpack.c.b16 %v366, %v365
      %v376 = vpack.c.b16 %v368, %v367
      %385 = vmatprep.subr.bf16.mxu0 0
      %386 = vmatpush1.bf16.msra.mxu0 %v376
      %387 = vmatprep.subr.bf16.mxu0 0
      %388 = vmatpush1.bf16.msra.mxu0 %v375
      %389 = vmatprep.subr.bf16.mxu0 0
      %390 = vmatpush1.bf16.msra.mxu0 %v374
      %391 = vmatprep.subr.bf16.mxu0 0
      %392 = vmatpush1.bf16.msra.mxu0 %v373
      %393 = vmatprep.subr.bf16.mxu0 0
      %394 = vmatpush1.bf16.msra.mxu0 %v372
      %395 = vmatprep.subr.bf16.mxu0 0
      %396 = vmatpush1.bf16.msra.mxu0 %v371
      %397 = vmatprep.subr.bf16.mxu0 0
      %398 = vmatpush1.bf16.msra.mxu0 %v370
      %399 = vmatprep.subr.bf16.mxu0 0
      %400 = vmatpush1.bf16.msra.mxu0 %v369
      %401 = vmatprep.subr.bf16.mxu0 0
      %402 = vmatpush2.bf16.msra.mxu0 0
      %403 = vmatprep.subr.bf16.mxu0 0
      %404 = vmatpush2.bf16.msra.mxu0 0
      %405 = vmatprep.subr.bf16.mxu0 0
      %406 = vmatpush2.bf16.msra.mxu0 0
      %407 = vmatprep.subr.bf16.mxu0 0
      %408 = vmatpush2.bf16.msra.mxu0 0
      %409 = vmatprep.subr.bf16.mxu0 0
      %410 = vmatpush2.bf16.msra.mxu0 0
      %411 = vmatprep.subr.bf16.mxu0 0
      %412 = vmatpush2.bf16.msra.mxu0 0
      %413 = vmatprep.subr.bf16.mxu0 0
      %414 = vmatpush2.bf16.msra.mxu0 0
      %415 = vmatprep.subr.bf16.mxu0 0
      %416 = vmatpush2.bf16.msra.mxu0 0
      %417 = vmatprep.mubr.bf16.mxu0 0
      %418 = vmatmul.mubr.bf16.gmra.mxu0 %v321
      %v419 = vpop.f32.mrf.mxu0
      %v420 = vadd.f32 0.0, %v419
      %v421 = vpop.f32.mrf.mxu0
      %v422 = vpop.f32.mrf.mxu0
      %v423 = vadd.f32 0.0, %v422
      %v424 = vpop.f32.mrf.mxu0
      %425 = vmatprep.mubr.bf16.mxu0 0
      %426 = vmatmul.mubr.bf16.gmra.mxu0 %v322
      %v427 = vpop.f32.mrf.mxu0
      %v428 = vadd.f32 0.0, %v427
      %v429 = vpop.f32.mrf.mxu0
      %v430 = vpop.f32.mrf.mxu0
      %v431 = vadd.f32 0.0, %v430
      %v432 = vpop.f32.mrf.mxu0
      %433 = vmatprep.mubr.bf16.mxu0 0
      %434 = vmatmul.mubr.bf16.gmra.mxu0 %v323
      %v435 = vpop.f32.mrf.mxu0
      %v436 = vadd.f32 0.0, %v435
      %v437 = vpop.f32.mrf.mxu0
      %v438 = vpop.f32.mrf.mxu0
      %v439 = vadd.f32 0.0, %v438
      %v440 = vpop.f32.mrf.mxu0
      %441 = vmatprep.mubr.bf16.mxu0 0
      %442 = vmatmul.mubr.bf16.gmra.mxu0 %v324
      %v443 = vpop.f32.mrf.mxu0
      %v444 = vadd.f32 0.0, %v443
      %v445 = vpop.f32.mrf.mxu0
      %v446 = vpop.f32.mrf.mxu0
      %v447 = vadd.f32 0.0, %v446
      %v448 = vpop.f32.mrf.mxu0
      %449 = vmatprep.mubr.bf16.mxu0 0
      %450 = vmatmul.mubr.bf16.gmra.mxu0 %v325
      %v451 = vpop.f32.mrf.mxu0
      %v452 = vadd.f32 0.0, %v451
      %v453 = vpop.f32.mrf.mxu0
      %v454 = vpop.f32.mrf.mxu0
      %v455 = vadd.f32 0.0, %v454
      %v456 = vpop.f32.mrf.mxu0
      %457 = vmatprep.mubr.bf16.mxu0 0
      %458 = vmatmul.mubr.bf16.gmra.mxu0 %v326
      %v459 = vpop.f32.mrf.mxu0
      %v460 = vadd.f32 0.0, %v459
      %v461 = vpop.f32.mrf.mxu0
      %v462 = vpop.f32.mrf.mxu0
      %v463 = vadd.f32 0.0, %v462
      %v464 = vpop.f32.mrf.mxu0
      %465 = vmatprep.mubr.bf16.mxu0 0
      %466 = vmatmul.mubr.bf16.gmra.mxu0 %v327
      %v467 = vpop.f32.mrf.mxu0
      %v468 = vadd.f32 0.0, %v467
      %v469 = vpop.f32.mrf.mxu0
      %v470 = vpop.f32.mrf.mxu0
      %v471 = vadd.f32 0.0, %v470
      %v472 = vpop.f32.mrf.mxu0
      %473 = vmatprep.mubr.bf16.mxu0 0
      %474 = vmatmul.mubr.bf16.gmra.mxu0 %v328
      %v475 = vpop.f32.mrf.mxu0
      %v476 = vadd.f32 0.0, %v475
      %v477 = vpop.f32.mrf.mxu0
      %v478 = vpop.f32.mrf.mxu0
      %v479 = vadd.f32 0.0, %v478
      %v480 = vpop.f32.mrf.mxu0
      %481 = vdwg.mxu0
      %v482 = vld [vmem:[#allocation2] sm:$0xff]
      %v483 = vld [vmem:[#allocation2 + $0x8] sm:$0xff]
      %v484 = vld [vmem:[#allocation2 + $0x10] sm:$0xff]
      %v485 = vld [vmem:[#allocation2 + $0x18] sm:$0xff]
      %v486 = vld [vmem:[#allocation2 + $0x20] sm:$0xff]
      %v487 = vld [vmem:[#allocation2 + $0x28] sm:$0xff]
      %v488 = vld [vmem:[#allocation2 + $0x30] sm:$0xff]
      %v489 = vld [vmem:[#allocation2 + $0x38] sm:$0xff]
      %v490 = vld [vmem:[#allocation2 + $0x40] sm:$0xff]
      %v491 = vld [vmem:[#allocation2 + $0x48] sm:$0xff]
      %v492 = vld [vmem:[#allocation2 + $0x50] sm:$0xff]
      %v493 = vld [vmem:[#allocation2 + $0x58] sm:$0xff]
      %v494 = vld [vmem:[#allocation2 + $0x60] sm:$0xff]
      %v495 = vld [vmem:[#allocation2 + $0x68] sm:$0xff]
      %v496 = vld [vmem:[#allocation2 + $0x70] sm:$0xff]
      %v497 = vld [vmem:[#allocation2 + $0x78] sm:$0xff]
      %vm498 = vcmask 523264
      %v499 = vsel %vm498, %v420, 0.0
      %500 = vadd.xlane.f32.xlu0 %v499
      %v501 = vpop.xlane.xlu0 %500
      %v502 = vsel %vm498, %v423, 0.0
      %503 = vadd.xlane.f32.xlu0 %v502
      %v504 = vpop.xlane.xlu0 %503
      %v505 = vsel %vm498, %v428, 0.0
      %506 = vadd.xlane.f32.xlu0 %v505
      %v507 = vpop.xlane.xlu0 %506
      %v508 = vsel %vm498, %v431, 0.0
      %509 = vadd.xlane.f32.xlu0 %v508
      %v510 = vpop.xlane.xlu0 %509
      %v511 = vsel %vm498, %v436, 0.0
      %512 = vadd.xlane.f32.xlu0 %v511
      %v513 = vpop.xlane.xlu0 %512
      %v514 = vsel %vm498, %v439, 0.0
      %515 = vadd.xlane.f32.xlu0 %v514
      %v516 = vpop.xlane.xlu0 %515
      %v517 = vsel %vm498, %v444, 0.0
      %518 = vadd.xlane.f32.xlu0 %v517
      %v519 = vpop.xlane.xlu0 %518
      %v520 = vsel %vm498, %v447, 0.0
      %521 = vadd.xlane.f32.xlu0 %v520
      %v522 = vpop.xlane.xlu0 %521
      %v523 = vsel %vm498, %v452, 0.0
      %524 = vadd.xlane.f32.xlu0 %v523
      %v525 = vpop.xlane.xlu0 %524
      %v526 = vsel %vm498, %v455, 0.0
      %527 = vadd.xlane.f32.xlu0 %v526
      %v528 = vpop.xlane.xlu0 %527
      %v529 = vsel %vm498, %v460, 0.0
      %530 = vadd.xlane.f32.xlu0 %v529
      %v531 = vpop.xlane.xlu0 %530
      %v532 = vsel %vm498, %v463, 0.0
      %533 = vadd.xlane.f32.xlu0 %v532
      %v534 = vpop.xlane.xlu0 %533
      %v535 = vsel %vm498, %v468, 0.0
      %536 = vadd.xlane.f32.xlu0 %v535
      %v537 = vpop.xlane.xlu0 %536
      %v538 = vsel %vm498, %v471, 0.0
      %539 = vadd.xlane.f32.xlu0 %v538
      %v540 = vpop.xlane.xlu0 %539
      %v541 = vsel %vm498, %v476, 0.0
      %542 = vadd.xlane.f32.xlu0 %v541
      %v543 = vpop.xlane.xlu0 %542
      %v544 = vsel %vm498, %v479, 0.0
      %545 = vadd.xlane.f32.xlu0 %v544
      %v546 = vpop.xlane.xlu0 %545
      %v547 = vadd.f32 %v482, %v501
      %v548 = vadd.f32 %v483, %v504
      %v549 = vadd.f32 %v484, %v507
      %v550 = vadd.f32 %v485, %v510
      %v551 = vadd.f32 %v486, %v513
      %v552 = vadd.f32 %v487, %v516
      %v553 = vadd.f32 %v488, %v519
      %v554 = vadd.f32 %v489, %v522
      %v555 = vadd.f32 %v490, %v525
      %v556 = vadd.f32 %v491, %v528
      %v557 = vadd.f32 %v492, %v531
      %v558 = vadd.f32 %v493, %v534
      %v559 = vadd.f32 %v494, %v537
      %v560 = vadd.f32 %v495, %v540
      %v561 = vadd.f32 %v496, %v543
      %v562 = vadd.f32 %v497, %v546
      %vm563 = vcmask 7168
      %564 = vst.msk [vmem:[#allocation2] sm:$0xff] %vm563, %v547
      %565 = vst.msk [vmem:[#allocation2 + $0x8] sm:$0xff] %vm563, %v548
      %566 = vst.msk [vmem:[#allocation2 + $0x10] sm:$0xff] %vm563, %v549
      %567 = vst.msk [vmem:[#allocation2 + $0x18] sm:$0xff] %vm563, %v550
      %568 = vst.msk [vmem:[#allocation2 + $0x20] sm:$0xff] %vm563, %v551
      %569 = vst.msk [vmem:[#allocation2 + $0x28] sm:$0xff] %vm563, %v552
      %570 = vst.msk [vmem:[#allocation2 + $0x30] sm:$0xff] %vm563, %v553
      %571 = vst.msk [vmem:[#allocation2 + $0x38] sm:$0xff] %vm563, %v554
      %572 = vst.msk [vmem:[#allocation2 + $0x40] sm:$0xff] %vm563, %v555
      %573 = vst.msk [vmem:[#allocation2 + $0x48] sm:$0xff] %vm563, %v556
      %574 = vst.msk [vmem:[#allocation2 + $0x50] sm:$0xff] %vm563, %v557
      %575 = vst.msk [vmem:[#allocation2 + $0x58] sm:$0xff] %vm563, %v558
      %576 = vst.msk [vmem:[#allocation2 + $0x60] sm:$0xff] %vm563, %v559
      %577 = vst.msk [vmem:[#allocation2 + $0x68] sm:$0xff] %vm563, %v560
      %578 = vst.msk [vmem:[#allocation2 + $0x70] sm:$0xff] %vm563, %v561
      %579 = vst.msk [vmem:[#allocation2 + $0x78] sm:$0xff] %vm563, %v562
      %v580 = vld [vmem:[#allocation3] sm:$0xff]
      %v581 = vld [vmem:[#allocation3 + $0x8] sm:$0xff]
      %v582 = vld [vmem:[#allocation3 + $0x10] sm:$0xff]
      %v583 = vld [vmem:[#allocation3 + $0x18] sm:$0xff]
      %v584 = vld [vmem:[#allocation3 + $0x20] sm:$0xff]
      %v585 = vld [vmem:[#allocation3 + $0x28] sm:$0xff]
      %v586 = vld [vmem:[#allocation3 + $0x30] sm:$0xff]
      %v587 = vld [vmem:[#allocation3 + $0x38] sm:$0xff]
      %v588 = vld [vmem:[#allocation3 + $0x40] sm:$0xff]
      %v589 = vld [vmem:[#allocation3 + $0x48] sm:$0xff]
      %v590 = vld [vmem:[#allocation3 + $0x50] sm:$0xff]
      %v591 = vld [vmem:[#allocation3 + $0x58] sm:$0xff]
      %v592 = vld [vmem:[#allocation3 + $0x60] sm:$0xff]
      %v593 = vld [vmem:[#allocation3 + $0x68] sm:$0xff]
      %v594 = vld [vmem:[#allocation3 + $0x70] sm:$0xff]
      %v595 = vld [vmem:[#allocation3 + $0x78] sm:$0xff]
      %v596 = vmul.f32 %v420, %v420
      %v597 = vmul.f32 %v423, %v423
      %v598 = vmul.f32 %v428, %v428
      %v599 = vmul.f32 %v431, %v431
      %v600 = vmul.f32 %v436, %v436
      %v601 = vmul.f32 %v439, %v439
      %v602 = vmul.f32 %v444, %v444
      %v603 = vmul.f32 %v447, %v447
      %v604 = vmul.f32 %v452, %v452
      %v605 = vmul.f32 %v455, %v455
      %v606 = vmul.f32 %v460, %v460
      %v607 = vmul.f32 %v463, %v463
      %v608 = vmul.f32 %v468, %v468
      %v609 = vmul.f32 %v471, %v471
      %v610 = vmul.f32 %v476, %v476
      %v611 = vmul.f32 %v479, %v479
      %v612 = vsel %vm498, %v596, 0.0
      %613 = vadd.xlane.f32.xlu0 %v612
      %v614 = vpop.xlane.xlu0 %613
      %v615 = vsel %vm498, %v597, 0.0
      %616 = vadd.xlane.f32.xlu0 %v615
      %v617 = vpop.xlane.xlu0 %616
      %v618 = vsel %vm498, %v598, 0.0
      %619 = vadd.xlane.f32.xlu0 %v618
      %v620 = vpop.xlane.xlu0 %619
      %v621 = vsel %vm498, %v599, 0.0
      %622 = vadd.xlane.f32.xlu0 %v621
      %v623 = vpop.xlane.xlu0 %622
      %v624 = vsel %vm498, %v600, 0.0
      %625 = vadd.xlane.f32.xlu0 %v624
      %v626 = vpop.xlane.xlu0 %625
      %v627 = vsel %vm498, %v601, 0.0
      %628 = vadd.xlane.f32.xlu0 %v627
      %v629 = vpop.xlane.xlu0 %628
      %v630 = vsel %vm498, %v602, 0.0
      %631 = vadd.xlane.f32.xlu0 %v630
      %v632 = vpop.xlane.xlu0 %631
      %v633 = vsel %vm498, %v603, 0.0
      %634 = vadd.xlane.f32.xlu0 %v633
      %v635 = vpop.xlane.xlu0 %634
      %v636 = vsel %vm498, %v604, 0.0
      %637 = vadd.xlane.f32.xlu0 %v636
      %v638 = vpop.xlane.xlu0 %637
      %v639 = vsel %vm498, %v605, 0.0
      %640 = vadd.xlane.f32.xlu0 %v639
      %v641 = vpop.xlane.xlu0 %640
      %v642 = vsel %vm498, %v606, 0.0
      %643 = vadd.xlane.f32.xlu0 %v642
      %v644 = vpop.xlane.xlu0 %643
      %v645 = vsel %vm498, %v607, 0.0
      %646 = vadd.xlane.f32.xlu0 %v645
      %v647 = vpop.xlane.xlu0 %646
      %v648 = vsel %vm498, %v608, 0.0
      %649 = vadd.xlane.f32.xlu0 %v648
      %v650 = vpop.xlane.xlu0 %649
      %v651 = vsel %vm498, %v609, 0.0
      %652 = vadd.xlane.f32.xlu0 %v651
      %v653 = vpop.xlane.xlu0 %652
      %v654 = vsel %vm498, %v610, 0.0
      %655 = vadd.xlane.f32.xlu0 %v654
      %v656 = vpop.xlane.xlu0 %655
      %v657 = vsel %vm498, %v611, 0.0
      %658 = vadd.xlane.f32.xlu0 %v657
      %v659 = vpop.xlane.xlu0 %658
      %v660 = vadd.f32 %v580, %v614
      %v661 = vadd.f32 %v581, %v617
      %v662 = vadd.f32 %v582, %v620
      %v663 = vadd.f32 %v583, %v623
      %v664 = vadd.f32 %v584, %v626
      %v665 = vadd.f32 %v585, %v629
      %v666 = vadd.f32 %v586, %v632
      %v667 = vadd.f32 %v587, %v635
      %v668 = vadd.f32 %v588, %v638
      %v669 = vadd.f32 %v589, %v641
      %v670 = vadd.f32 %v590, %v644
      %v671 = vadd.f32 %v591, %v647
      %v672 = vadd.f32 %v592, %v650
      %v673 = vadd.f32 %v593, %v653
      %v674 = vadd.f32 %v594, %v656
      %v675 = vadd.f32 %v595, %v659
      %676 = vst.msk [vmem:[#allocation3] sm:$0xff] %vm563, %v660
      %677 = vst.msk [vmem:[#allocation3 + $0x8] sm:$0xff] %vm563, %v661
      %678 = vst.msk [vmem:[#allocation3 + $0x10] sm:$0xff] %vm563, %v662
      %679 = vst.msk [vmem:[#allocation3 + $0x18] sm:$0xff] %vm563, %v663
      %680 = vst.msk [vmem:[#allocation3 + $0x20] sm:$0xff] %vm563, %v664
      %681 = vst.msk [vmem:[#allocation3 + $0x28] sm:$0xff] %vm563, %v665
      %682 = vst.msk [vmem:[#allocation3 + $0x30] sm:$0xff] %vm563, %v666
      %683 = vst.msk [vmem:[#allocation3 + $0x38] sm:$0xff] %vm563, %v667
      %684 = vst.msk [vmem:[#allocation3 + $0x40] sm:$0xff] %vm563, %v668
      %685 = vst.msk [vmem:[#allocation3 + $0x48] sm:$0xff] %vm563, %v669
      %686 = vst.msk [vmem:[#allocation3 + $0x50] sm:$0xff] %vm563, %v670
      %687 = vst.msk [vmem:[#allocation3 + $0x58] sm:$0xff] %vm563, %v671
      %688 = vst.msk [vmem:[#allocation3 + $0x60] sm:$0xff] %vm563, %v672
      %689 = vst.msk [vmem:[#allocation3 + $0x68] sm:$0xff] %vm563, %v673
      %690 = vst.msk [vmem:[#allocation3 + $0x70] sm:$0xff] %vm563, %v674
      %691 = vst.msk [vmem:[#allocation3 + $0x78] sm:$0xff] %vm563, %v675
      %692 = vst.msk [vmem:[%s218] sm:$0xff] %vm498, %v420
      // Predicated region
      $region41: #{down_sample_discriminator.1} parent=35 // pred_check
        %p693 = pneg %p220
      $region42: #{down_sample_discriminator.1} parent=35 // pred_check_branch
        %695 = sbr.rel (%p693) target = $region44
      $region43: #{down_sample_discriminator.1} parent=35 // pred_region
        %v696 = vld [vmem:[#allocation2] sm:$0xff]
        %v697 = vmul.f32 %v696, 0.015625
        %v698 = vld [vmem:[#allocation3] sm:$0xff]
        %v699 = vmul.f32 %v698, 0.015625
        %v700 = vmul.f32 %v697, %v697
        %v701 = vsub.f32 %v699, %v700
        %v702 = vmax.f32 %v701, 0.0
        %v703 = vld [vmem:[%s2] sm:$0xff]
        %v704 = vadd.f32 %v702, 1e-05
        %v705 = vrsqrt.pop %v704
        %v706 = vmul.f32 %v703, %v705
        %v707 = vld [vmem:[%s3] sm:$0xff]
        %v708 = vmul.f32 %v697, %v706
        %v709 = vsub.f32 %v707, %v708
        %v710 = vld [vmem:[%s218] sm:$0xff]
        %712 = vset.pattern.permute.xlu0 0
        %713 = vperm.xlu0 %712, %v706
        %v714 = vpop.permute.xlu0 %713
        %v716 = vmul.f32 %v710, %v714
        %718 = vset.pattern.permute.xlu0 0
        %719 = vperm.xlu0 %718, %v709
        %v720 = vpop.permute.xlu0 %719
        %v722 = vadd.f32 %v716, %v720
        %v723 = vxor.u32 %v722, 2147483648
        %v724 = vmul.f32 %v723, 1.442695
        %v725 = vpow.pop %v724
        %v726 = vadd.f32 %v725, 1.0
        %v727 = vrcp.pop %v726
        %v728 = vmul.f32 1.0, %v727
        %v729 = vmul.f32 %v722, %v728
        %730 = vst.msk [vmem:[%s218] sm:$0xff] %vm498, %v729
      $region44: #{down_sample_discriminator.1} parent=35 // pred_fallthru
        _
      %p731 = scmp.lt.s32.totalorder %s19, 1
      %s732 = scalar_select %p731, %s19, 1
      %s733 = smul.addr %s732, 8
      %s734 = scalar_lea.vmem %s4, %s733
      // Predicated region
      $region45: #{down_sample_discriminator.1} parent=35 // pred_check
        %p735 = pneg %p136
      $region46: #{down_sample_discriminator.1} parent=35 // pred_check_branch
        %737 = sbr.rel (%p735) target = $region48
      $region47: #{down_sample_discriminator.1} parent=35 // pred_region
        _
      $region48: #{down_sample_discriminator.1} parent=35 // pred_fallthru
        _
    $region36: #{down_sample_discriminator.1} parent=5 // pred_fallthru
      _
    %p738 = scmp.le.s32.totalorder 2, %s10
    // Predicated region
    $region49: #{down_sample_discriminator.1} parent=5 // pred_check
      %p739 = pneg %p738
    $region50: #{down_sample_discriminator.1} parent=5 // pred_check_branch
      %741 = sbr.rel (%p739) target = $region52
    $region51: #{down_sample_discriminator.1} parent=5 // pred_region
      %s742 = ssub.s32 %s10, 2
      // Predicated region
      $region53: #{down_sample_discriminator.1} parent=51 // pred_check
        %p743 = pneg %p142
      $region54: #{down_sample_discriminator.1} parent=51 // pred_check_branch
        %745 = sbr.rel (%p743) target = $region56
      $region55: #{down_sample_discriminator.1} parent=51 // pred_region
        %p746 = scmp.lt.s32.totalorder %s21, 1
        %s747 = scalar_select %p746, %s21, 1
        %s748 = smul.addr %s747, 8
        %s749 = scalar_lea.vmem %s4, %s748
      $region56: #{down_sample_discriminator.1} parent=51 // pred_fallthru
        _
    $region52: #{down_sample_discriminator.1} parent=5 // pred_fallthru
      _
  $region6: #{down_sample_discriminator.1} parent=0 // loop_footer
    %s14 = sadd.s32 1, %s10
  $region7: #{down_sample_discriminator.1} parent=0 // loop_footer_branch
    %9 = sbr.rel target = $region3
  $region8: #{down_sample_discriminator.1} parent=0 // loop_exit
    _

</llo_original>
